<compile_context>
chip_gen: v7x
topology: tpu7x:2x2x1
jax: 0.10.0
libtpu: 0.0.40
codegen_flags: <defaults>
</compile_context>

<pallas_src>
import math

import jax
import jax.numpy as jnp
from jax.experimental import pallas as pl
from jax.experimental.pallas import tpu as pltpu

LANES = 128
# Keep each block <= 4 MiB so double-buffered input + output (~4x block) stays well
# under the 32 MiB default scoped VMEM even on v7x (64 MiB physical VMEM).
MAX_BLOCK_BYTES = 4 * 1024 * 1024


def _shuffle_copy_kernel(perm_ref, x_ref, o_ref):
    # Pure copy: the channel permutation is performed by the input index_map's DMA.
    del perm_ref
    o_ref[...] = x_ref[...]


def _pick_batch_block(n, plane_block_bytes):
    """Largest divisor of n whose block stays under MAX_BLOCK_BYTES (>= 1)."""
    bn = 1
    for d in range(1, n + 1):
        if n % d == 0 and d * plane_block_bytes <= MAX_BLOCK_BYTES:
            bn = d
    return bn


def pallas_channels_shuffle(x, permutation):
    """out[:, c, ...] = x[:, permutation[c], ...] via a Pallas DMA-permute kernel."""
    n, c = x.shape[0], x.shape[1]
    hw = math.prod(x.shape[2:]) if x.ndim > 2 else 1

    # Lane-dense view of each channel plane: (sub, 128) when the plane size allows
    # (unmasked vst stores / large contiguous DMA descriptors), otherwise the full
    # plane in the lane dim. In both cases the block's last two dims equal the full
    # array dims, satisfying the (8, 128) constraint. Metadata-only reshape.
    if hw % LANES == 0:
        sub, lanes = hw // LANES, LANES
    else:
        sub, lanes = 1, hw
    x_view = x.reshape(n, c, sub, lanes)

    plane_block_bytes = sub * lanes * x.dtype.itemsize
    # Group batch elements per block (strided rectangular DMA) to amortize the
    # ~0.35 us per-grid-step overhead while respecting the VMEM budget.
    bn = _pick_batch_block(n, plane_block_bytes)
    # TODO(synk): if a single channel plane exceeds MAX_BLOCK_BYTES, also split the
    # spatial (sub) axis into a third grid dimension instead of taking one huge block.

    grid = (n // bn, c)
    block = (bn, 1, sub, lanes)

    out_view = pl.pallas_call(
        _shuffle_copy_kernel,
        out_shape=jax.ShapeDtypeStruct((n, c, sub, lanes), x.dtype),
        grid_spec=pltpu.PrefetchScalarGridSpec(
            num_scalar_prefetch=1,
            grid=grid,
            # Gather the permuted input channel for this output channel via the DMA.
            in_specs=[pl.BlockSpec(block, lambda b, ci, perm: (b, perm[ci], 0, 0))],
            out_specs=pl.BlockSpec(block, lambda b, ci, perm: (b, ci, 0, 0)),
        ),
        compiler_params=pltpu.CompilerParams(
            # Every block is an independent copy -> shard grid across TensorCores (v7x);
            # near-zero cost on single-TC v5e/v6e.
            dimension_semantics=("parallel", "parallel"),
        ),
    )(permutation.astype(jnp.int32), x_view)

    return out_view.reshape(x.shape)


if __name__ == "__main__":
    key = jax.random.PRNGKey(0)
    kx, kp = jax.random.split(key)

    # NCHW input, consistent with ConvBlock usage of this layer.
    N, C, H, W = 2, 4, 16, 16
    x = jax.random.normal(kx, (N, C, H, W), dtype=jnp.float32)

    # Fixed random permutation chosen "at init time" (mirrors the registered
    # np.random.permutation buffer in the PyTorch module).
    permutation = jax.random.permutation(kp, C).astype(jnp.int32)

    shuffle = jax.jit(pallas_channels_shuffle)
    y = shuffle(x, permutation)
    jax.block_until_ready(y)

    # Reference: inputs[:, permutation, ...]
    y_ref = x[:, permutation, :, :]
    assert y.shape == x.shape and y.dtype == x.dtype
    assert jnp.array_equal(y, y_ref)

    print("KERNEL_OK")
</pallas_src>

<mosaic_0001>
module attributes {stable_mosaic.version = 11 : i64} {
  func.func @_shuffle_copy_kernel(%arg0: i32, %arg1: i32, %arg2: memref<4xi32, #tpu.memory_space<smem>>, %arg3: memref<2x1x2x128xf32, #tpu.memory_space<vmem>>, %arg4: memref<2x1x2x128xf32, #tpu.memory_space<vmem>>) attributes {dimension_semantics = [#tpu.dimension_semantics<parallel>, #tpu.dimension_semantics<parallel>], iteration_bounds = array<i64: 1, 4>, scalar_prefetch = 1 : i64, scratch_operands = 0 : i64, tpu.core_type = #tpu.core_type<tc>, window_params = [{transform_indices = @transform_0, window_bounds = array<i64: 2, 1, 2, 128>}, {transform_indices = @transform_1, window_bounds = array<i64: 2, 1, 2, 128>}]} {
    %c0 = arith.constant 0 : index
    %c0_0 = arith.constant 0 : index
    %c0_1 = arith.constant 0 : index
    %c0_2 = arith.constant 0 : index
    %0 = vector.load %arg3[%c0, %c0_0, %c0_1, %c0_2] : memref<2x1x2x128xf32, #tpu.memory_space<vmem>>, vector<2x1x2x128xf32>
    %c0_3 = arith.constant 0 : index
    %c0_4 = arith.constant 0 : index
    %c0_5 = arith.constant 0 : index
    %c0_6 = arith.constant 0 : index
    %1 = vector.load %arg4[%c0_3, %c0_4, %c0_5, %c0_6] : memref<2x1x2x128xf32, #tpu.memory_space<vmem>>, vector<2x1x2x128xf32>
    tpu.vector_store %arg4[%c0_3, %c0_4, %c0_5, %c0_6], %0 {strides = array<i32>} : memref<2x1x2x128xf32, #tpu.memory_space<vmem>>, vector<2x1x2x128xf32>,
    return
  }
  func.func @transform_0(%arg0: i32, %arg1: i32, %arg2: memref<4xi32, #tpu.memory_space<smem>>) -> (i32, i32, i32, i32) {
    %0 = arith.index_cast %arg1 : i32 to index
    %1 = memref.load %arg2[%0] : memref<4xi32, #tpu.memory_space<smem>>
    %c0_i32 = arith.constant 0 : i32
    %c0_i32_0 = arith.constant 0 : i32
    %c0_i32_1 = arith.constant 0 : i32
    return %arg0, %1, %c0_i32, %c0_i32_0 : i32, i32, i32, i32
  }
  func.func @transform_1(%arg0: i32, %arg1: i32, %arg2: memref<4xi32, #tpu.memory_space<smem>>) -> (i32, i32, i32, i32) {
    %c0_i32 = arith.constant 0 : i32
    %c0_i32_0 = arith.constant 0 : i32
    %c0_i32_1 = arith.constant 0 : i32
    return %arg0, %arg1, %c0_i32, %c0_i32_0 : i32, i32, i32, i32
  }
}

</mosaic_0001>

<llo_original>
// kernel: pallas_channels_shuffle.1
$region0: #{pallas_channels_shuffle.1}
  #allocation0 [shape = 'u32[]', space=smem, size = 0x4, offset = 0x4, fixed_abs, tag = 'smem constant byte address 0x4 - core index']
  #allocation1 [shape = 'u32[144,128]{1,0:T(1,128)}', space=vmem, size = 0x12000, scoped, tag = 'internal scratch']
  #allocation2 [shape = 's32[1]{0}', space=sflag, size = 0x4, scoped, tag = 'scoped memory for pallas_channels_shuffle.1']
  #allocation3 [shape = 'u8[512]{0}', space=smem, size = 0x200, scoped, tag = 'prefetched SMEM operand 0']
  %s0 = inlined_call_operand.vmem [shape: s32[4], index: 0, kind: input, shape index: {}]
  %s1 = inlined_call_operand.vmem [shape: f32[2,4,2,128], index: 1, kind: input, shape index: {}]
  %s2 = inlined_call_operand.vmem [shape: f32[2,4,2,128], index: 2, kind: output, shape index: {}]
  %s3 = sld [smem:[#allocation0]]
  $region101: #{pallas_channels_shuffle.1} parent=0
    _
  %s5 = ssub.s32 1, %s3
  %s6 = scalar_select 0, %s5, %s3
  %s7 = sshll.u32 %s0, 4
  %s8 = int_to_ptr.vmem [resolvable:$true] %s7
  %10 = dma.vmem_to_smem %s8, 16, [#allocation3], [#allocation2]
  %11 = dma.done [#allocation2], 16
  %12 = sfence
  $region1: #{pallas_channels_shuffle.1} parent=0
    #allocation4 [shape = 'u8[4096]{0}', space=vmem, size = 0x1000, scoped, tag = 'input window, operand 1']
    #allocation5 [shape = 'u8[4096]{0}', space=vmem, size = 0x1000, scoped, tag = 'output window, operand 0']
    loop: start=0, step=1, limit=6
    $region2: #{pallas_channels_shuffle.1} parent=1 // loop_pre_header
      _
    $region3: #{pallas_channels_shuffle.1} parent=1 // loop_header
      %s14 = sphi 0, %s18
      %p15 = scmp.ge.s32.totalorder %s14, 6
      %s21 = sphi 0, %s33
      %s22 = sphi 0, %s29
      %s23 = sphi 0, %s21
      %s24 = sphi 0, %s22
      %s25 = sphi 0, %s23
      %s26 = sphi 0, %s24
      %s40 = sphi 0, %s42
      %s43 = sphi 0, %s40
      %s44 = sphi 0, %s43
      %s60 = sphi 0, %s44
      %s68 = sphi 0, %s70
      %s71 = sphi 0, %s68
      %s72 = sphi 0, %s71
      %s88 = sphi 0, %s72
    $region4: #{pallas_channels_shuffle.1} parent=1 // loop_header_branch
      %17 = sbr.rel (%p15) target = $region8
    $region5: #{pallas_channels_shuffle.1} parent=1 // loop_body
      %s19 = ssub.s32 %s14, 1
      %s20 = ssub.s32 %s14, 2
      %s27 = sadd.s32 1, %s22
      %p28 = scmp.ge.s32.totalorder %s27, 4
      %s29 = scalar_select %p28, 0, %s27
      %s30 = sadd.s32 1, %s21
      %s31 = scalar_select %p28, %s30, %s21
      %p32 = scmp.ge.s32.totalorder %s31, 1
      %s33 = scalar_select %p32, 0, %s31
      %s34 = sld [smem:[#allocation3 + %s22]]
      %s35 = sld [smem:[#allocation3 + %s29]]
      %s36 = ssub.s32 %s21, %s33
      %s37 = ssub.s32 %s34, %s35
      %s38 = sor.u32 %s36, %s37
      %p39 = scmp.eq.s32.totalorder %s38, 0
      %s41 = sadd.s32 %s40, 1
      %s42 = scalar_select %p39, %s40, %s41
      %p45 = pneg %p39
      %p46 = scmp.eq.s32.totalorder %s14, 3
      %p47 = por %p45, %p46
      %p48 = scmp.ne.s32.totalorder %s40, %s43
      %p49 = scmp.eq.s32.totalorder %s14, 0
      %p50 = por %p48, %p49
      %p51 = scmp.ne.s32.totalorder %s40, %s43
      %p52 = scmp.eq.s32.totalorder %s19, 3
      %p53 = por %p51, %p52
      %p54 = scmp.ne.s32.totalorder %s43, %s44
      %p55 = scmp.eq.s32.totalorder %s19, 0
      %p56 = por %p54, %p55
      %p57 = scmp.ne.s32.totalorder %s43, %s44
      %p58 = scmp.eq.s32.totalorder %s20, 3
      %p59 = por %p57, %p58
      %p61 = scmp.ne.s32.totalorder %s44, %s60
      %p62 = scmp.eq.s32.totalorder %s20, 0
      %p63 = por %p61, %p62
      %s64 = ssub.s32 %s21, %s33
      %s65 = ssub.s32 %s22, %s29
      %s66 = sor.u32 %s64, %s65
      %p67 = scmp.eq.s32.totalorder %s66, 0
      %s69 = sadd.s32 %s68, 1
      %s70 = scalar_select %p67, %s68, %s69
      %p73 = pneg %p67
      %p74 = scmp.eq.s32.totalorder %s14, 3
      %p75 = por %p73, %p74
      %p76 = scmp.ne.s32.totalorder %s68, %s71
      %p77 = scmp.eq.s32.totalorder %s14, 0
      %p78 = por %p76, %p77
      %p79 = scmp.ne.s32.totalorder %s68, %s71
      %p80 = scmp.eq.s32.totalorder %s19, 3
      %p81 = por %p79, %p80
      %p82 = scmp.ne.s32.totalorder %s71, %s72
      %p83 = scmp.eq.s32.totalorder %s19, 0
      %p84 = por %p82, %p83
      %p85 = scmp.ne.s32.totalorder %s71, %s72
      %p86 = scmp.eq.s32.totalorder %s20, 3
      %p87 = por %p85, %p86
      %p89 = scmp.ne.s32.totalorder %s72, %s88
      %p90 = scmp.eq.s32.totalorder %s20, 0
      %p91 = por %p89, %p90
      %p92 = scmp.le.s32.totalorder 1, %s14
      %p93 = scmp.lt.s32.totalorder %s14, 5
      %p94 = pnand %p92, %p93
      %p95 = pneg %p94
      // Predicated region
      $region9: #{pallas_channels_shuffle.1} parent=5 // pred_check
        _
      $region10: #{pallas_channels_shuffle.1} parent=5 // pred_check_branch
        %97 = sbr.rel (%p94) target = $region12
      $region11: #{pallas_channels_shuffle.1} parent=5 // pred_region
        %s98 = ssub.s32 %s14, 1
      $region12: #{pallas_channels_shuffle.1} parent=5 // pred_fallthru
        _
      %p99 = scmp.lt.s32.totalorder %s14, 4
      // Predicated region
      $region13: #{pallas_channels_shuffle.1} parent=5 // pred_check
        %p100 = pneg %p99
      $region14: #{pallas_channels_shuffle.1} parent=5 // pred_check_branch
        %102 = sbr.rel (%p100) target = $region16
      $region15: #{pallas_channels_shuffle.1} parent=5 // pred_region
        // Predicated region
        $region17: #{pallas_channels_shuffle.1} parent=15 // pred_check
          %p103 = pneg %p50
        $region18: #{pallas_channels_shuffle.1} parent=15 // pred_check_branch
          %105 = sbr.rel (%p103) target = $region20
        $region19: #{pallas_channels_shuffle.1} parent=15 // pred_region
          %s106 = sand.u32 %s40, 1
          %s107 = sand.u32 %s40, 1
          %s108 = smul.addr %s107, 4
          %s109 = scalar_lea.vmem [#allocation4], %s108
          %s110 = sld [smem:[#allocation3 + %s22]]
          %s111 = smul.u32 2, %s21
          %s112 = smul.addr %s111, 4
          %s113 = sadd.s32 %s110, %s112
          %s114 = smul.addr %s113, 2
          %s115 = scalar_lea.vmem %s1, %s114
          // Predicated region
          $region21: #{pallas_channels_shuffle.1} parent=19 // pred_check
            _
          $region22: #{pallas_channels_shuffle.1} parent=19 // pred_check_branch
            %117 = sbr.rel (0) target = $region24
          $region23: #{pallas_channels_shuffle.1} parent=19 // pred_region
            // Predicated region
            $region25: #{pallas_channels_shuffle.1} parent=23 // pred_check
              _
            $region26: #{pallas_channels_shuffle.1} parent=23 // pred_check_branch
              %119 = sbr.rel target = $region28
            $region27: #{pallas_channels_shuffle.1} parent=23 // pred_region
              // Predicated region
              $region40: #{pallas_channels_shuffle.1} parent=27 // pred_check
                _
              $region41: #{pallas_channels_shuffle.1} parent=27 // pred_check_branch
                %136 = sbr.rel (0) target = $region43
              $region42: #{pallas_channels_shuffle.1} parent=27 // pred_region
                loop: start=0, step=1, limit=1
                $region44: #{pallas_channels_shuffle.1} parent=42 // loop_pre_header
                  _
                $region45: #{pallas_channels_shuffle.1} parent=42 // loop_header
                  %s139 = sphi 0, %s143
                  %p140 = scmp.ge.s32.totalorder %s139, 1
                  %s144 = sphi %s115, %s115
                  %s145 = sphi %s109, %s109
                $region46: #{pallas_channels_shuffle.1} parent=42 // loop_header_branch
                  %142 = sbr.rel (%p140) target = $region50
                $region47: #{pallas_channels_shuffle.1} parent=42 // loop_body
                  %v146 = vld [vmem:[%s144] sm:$0x3]
                  %147 = vst [vmem:[%s145] sm:$0x3] %v146
                  %v148 = vld [vmem:[%s144 + $0x8] sm:$0x3]
                  %149 = vst [vmem:[%s145 + $0x2] sm:$0x3] %v148
                $region48: #{pallas_channels_shuffle.1} parent=42 // loop_footer
                  %s143 = sadd.s32 1, %s139
                $region49: #{pallas_channels_shuffle.1} parent=42 // loop_footer_branch
                  %138 = sbr.rel target = $region45
                $region50: #{pallas_channels_shuffle.1} parent=42 // loop_exit
                  _
              $region43: #{pallas_channels_shuffle.1} parent=27 // pred_fallthru
                _
            $region28: #{pallas_channels_shuffle.1} parent=23 // pred_fallthru
              _
            // Predicated region
            $region29: #{pallas_channels_shuffle.1} parent=23 // pred_check
              _
            $region30: #{pallas_channels_shuffle.1} parent=23 // pred_check_branch
              %121 = sbr.rel (0) target = $region32
            $region31: #{pallas_channels_shuffle.1} parent=23 // pred_region
              loop: start=0, step=1, limit=1
              $region33: #{pallas_channels_shuffle.1} parent=31 // loop_pre_header
                _
              $region34: #{pallas_channels_shuffle.1} parent=31 // loop_header
                %s124 = sphi 0, %s128
                %p125 = scmp.ge.s32.totalorder %s124, 1
                %s129 = sphi %s115, %s115
                %s130 = sphi %s109, %s109
              $region35: #{pallas_channels_shuffle.1} parent=31 // loop_header_branch
                %127 = sbr.rel (%p125) target = $region39
              $region36: #{pallas_channels_shuffle.1} parent=31 // loop_body
                %v131 = vld [vmem:[%s129] sm:$0x3]
                %132 = vst [vmem:[%s130] sm:$0x3] %v131
                %v133 = vld [vmem:[%s129 + $0x8] sm:$0x3]
                %134 = vst [vmem:[%s130 + $0x2] sm:$0x3] %v133
              $region37: #{pallas_channels_shuffle.1} parent=31 // loop_footer
                %s128 = sadd.s32 1, %s124
              $region38: #{pallas_channels_shuffle.1} parent=31 // loop_footer_branch
                %123 = sbr.rel target = $region34
              $region39: #{pallas_channels_shuffle.1} parent=31 // loop_exit
                _
            $region32: #{pallas_channels_shuffle.1} parent=23 // pred_fallthru
              _
          $region24: #{pallas_channels_shuffle.1} parent=19 // pred_fallthru
            _
          %150 = vnop
        $region20: #{pallas_channels_shuffle.1} parent=15 // pred_fallthru
          _
      $region16: #{pallas_channels_shuffle.1} parent=5 // pred_fallthru
        _
      %p151 = scmp.le.s32.totalorder 1, %s14
      %p152 = scmp.lt.s32.totalorder %s14, 5
      %p153 = pnand %p151, %p152
      %p154 = pneg %p153
      // Predicated region
      $region51: #{pallas_channels_shuffle.1} parent=5 // pred_check
        _
      $region52: #{pallas_channels_shuffle.1} parent=5 // pred_check_branch
        %156 = sbr.rel (%p153) target = $region54
      $region53: #{pallas_channels_shuffle.1} parent=5 // pred_region
        %s157 = ssub.s32 %s14, 1
        %s158 = sand.u32 %s43, 1
        %s159 = sand.u32 %s43, 1
        %s160 = smul.addr %s159, 4
        %s161 = scalar_lea.vmem [#allocation4], %s160
        // Predicated region
        $region55: #{pallas_channels_shuffle.1} parent=53 // pred_check
          %p162 = pneg %p56
        $region56: #{pallas_channels_shuffle.1} parent=53 // pred_check_branch
          %164 = sbr.rel (%p162) target = $region58
        $region57: #{pallas_channels_shuffle.1} parent=53 // pred_region
          _
        $region58: #{pallas_channels_shuffle.1} parent=53 // pred_fallthru
          _
        %s165 = sand.u32 %s43, 1
        %s166 = sand.u32 %s43, 1
        %s167 = smul.addr %s166, 4
        %s168 = scalar_lea.vmem [#allocation4], %s167
        %p169 = pneg %p56
        %p170 = pneg %p53
        %p171 = pneg %p84
        %p172 = pneg %p81
        %s173 = sand.u32 %s71, 1
        %s174 = sand.u32 %s71, 1
        %s175 = smul.addr %s174, 4
        %s176 = scalar_lea.vmem [#allocation5], %s175
        %s177 = sld [smem:[#allocation3 + %s24]]
        %s178 = smul.u32 2, %s23
        %s179 = smul.u32 2, %s23
        %v180 = vld [vmem:[%s161] sm:$0x3]
        %v181 = vld [vmem:[%s161 + $0x2] sm:$0x3]
        %182 = vst [vmem:[%s176] sm:$0x3] %v180
        %183 = vst [vmem:[%s176 + $0x2] sm:$0x3] %v181
        %s184 = sand.u32 %s71, 1
        %s185 = sand.u32 %s71, 1
        %s186 = smul.addr %s185, 4
        %s187 = scalar_lea.vmem [#allocation5], %s186
        // Predicated region
        $region59: #{pallas_channels_shuffle.1} parent=53 // pred_check
          %p188 = pneg %p81
        $region60: #{pallas_channels_shuffle.1} parent=53 // pred_check_branch
          %190 = sbr.rel (%p188) target = $region62
        $region61: #{pallas_channels_shuffle.1} parent=53 // pred_region
          %s191 = smul.u32 2, %s23
          %s192 = smul.addr %s191, 4
          %s193 = sadd.s32 %s24, %s192
          %s194 = smul.addr %s193, 2
          %s195 = scalar_lea.vmem %s2, %s194
          // Predicated region
          $region63: #{pallas_channels_shuffle.1} parent=61 // pred_check
            _
          $region64: #{pallas_channels_shuffle.1} parent=61 // pred_check_branch
            %197 = sbr.rel (0) target = $region66
          $region65: #{pallas_channels_shuffle.1} parent=61 // pred_region
            // Predicated region
            $region67: #{pallas_channels_shuffle.1} parent=65 // pred_check
              _
            $region68: #{pallas_channels_shuffle.1} parent=65 // pred_check_branch
              %199 = sbr.rel target = $region70
            $region69: #{pallas_channels_shuffle.1} parent=65 // pred_region
              // Predicated region
              $region82: #{pallas_channels_shuffle.1} parent=69 // pred_check
                _
              $region83: #{pallas_channels_shuffle.1} parent=69 // pred_check_branch
                %216 = sbr.rel (0) target = $region85
              $region84: #{pallas_channels_shuffle.1} parent=69 // pred_region
                loop: start=0, step=1, limit=1
                $region86: #{pallas_channels_shuffle.1} parent=84 // loop_pre_header
                  _
                $region87: #{pallas_channels_shuffle.1} parent=84 // loop_header
                  %s219 = sphi 0, %s223
                  %p220 = scmp.ge.s32.totalorder %s219, 1
                  %s224 = sphi %s187, %s187
                  %s225 = sphi %s195, %s195
                $region88: #{pallas_channels_shuffle.1} parent=84 // loop_header_branch
                  %222 = sbr.rel (%p220) target = $region92
                $region89: #{pallas_channels_shuffle.1} parent=84 // loop_body
                  %v226 = vld [vmem:[%s224] sm:$0x3]
                  %227 = vst [vmem:[%s225] sm:$0x3] %v226
                  %v228 = vld [vmem:[%s224 + $0x2] sm:$0x3]
                  %229 = vst [vmem:[%s225 + $0x8] sm:$0x3] %v228
                $region90: #{pallas_channels_shuffle.1} parent=84 // loop_footer
                  %s223 = sadd.s32 1, %s219
                $region91: #{pallas_channels_shuffle.1} parent=84 // loop_footer_branch
                  %218 = sbr.rel target = $region87
                $region92: #{pallas_channels_shuffle.1} parent=84 // loop_exit
                  _
              $region85: #{pallas_channels_shuffle.1} parent=69 // pred_fallthru
                _
            $region70: #{pallas_channels_shuffle.1} parent=65 // pred_fallthru
              _
            // Predicated region
            $region71: #{pallas_channels_shuffle.1} parent=65 // pred_check
              _
            $region72: #{pallas_channels_shuffle.1} parent=65 // pred_check_branch
              %201 = sbr.rel (0) target = $region74
            $region73: #{pallas_channels_shuffle.1} parent=65 // pred_region
              loop: start=0, step=1, limit=1
              $region75: #{pallas_channels_shuffle.1} parent=73 // loop_pre_header
                _
              $region76: #{pallas_channels_shuffle.1} parent=73 // loop_header
                %s204 = sphi 0, %s208
                %p205 = scmp.ge.s32.totalorder %s204, 1
                %s209 = sphi %s187, %s187
                %s210 = sphi %s195, %s195
              $region77: #{pallas_channels_shuffle.1} parent=73 // loop_header_branch
                %207 = sbr.rel (%p205) target = $region81
              $region78: #{pallas_channels_shuffle.1} parent=73 // loop_body
                %v211 = vld [vmem:[%s209] sm:$0x3]
                %212 = vst [vmem:[%s210] sm:$0x3] %v211
                %v213 = vld [vmem:[%s209 + $0x2] sm:$0x3]
                %214 = vst [vmem:[%s210 + $0x8] sm:$0x3] %v213
              $region79: #{pallas_channels_shuffle.1} parent=73 // loop_footer
                %s208 = sadd.s32 1, %s204
              $region80: #{pallas_channels_shuffle.1} parent=73 // loop_footer_branch
                %203 = sbr.rel target = $region76
              $region81: #{pallas_channels_shuffle.1} parent=73 // loop_exit
                _
            $region74: #{pallas_channels_shuffle.1} parent=65 // pred_fallthru
              _
          $region66: #{pallas_channels_shuffle.1} parent=61 // pred_fallthru
            _
          %230 = vnop
        $region62: #{pallas_channels_shuffle.1} parent=53 // pred_fallthru
          _
      $region54: #{pallas_channels_shuffle.1} parent=5 // pred_fallthru
        _
      %p231 = scmp.le.s32.totalorder 2, %s14
      // Predicated region
      $region93: #{pallas_channels_shuffle.1} parent=5 // pred_check
        %p232 = pneg %p231
      $region94: #{pallas_channels_shuffle.1} parent=5 // pred_check_branch
        %234 = sbr.rel (%p232) target = $region96
      $region95: #{pallas_channels_shuffle.1} parent=5 // pred_region
        %s235 = ssub.s32 %s14, 2
        // Predicated region
        $region97: #{pallas_channels_shuffle.1} parent=95 // pred_check
          %p236 = pneg %p87
        $region98: #{pallas_channels_shuffle.1} parent=95 // pred_check_branch
          %238 = sbr.rel (%p236) target = $region100
        $region99: #{pallas_channels_shuffle.1} parent=95 // pred_region
          %s239 = sand.u32 %s72, 1
          %s240 = sand.u32 %s72, 1
          %s241 = smul.addr %s240, 4
          %s242 = scalar_lea.vmem [#allocation5], %s241
        $region100: #{pallas_channels_shuffle.1} parent=95 // pred_fallthru
          _
      $region96: #{pallas_channels_shuffle.1} parent=5 // pred_fallthru
        _
    $region6: #{pallas_channels_shuffle.1} parent=1 // loop_footer
      %s18 = sadd.s32 1, %s14
    $region7: #{pallas_channels_shuffle.1} parent=1 // loop_footer_branch
      %13 = sbr.rel target = $region3
    $region8: #{pallas_channels_shuffle.1} parent=1 // loop_exit
      _

</llo_original>
